<compile_context>
chip_gen: v5e
topology: v5e:2x2
jax: 0.10.0
libtpu: 0.0.40
codegen_flags: <defaults>
</compile_context>

<pallas_src>
import functools

import jax
import jax.numpy as jnp
from jax import lax
from jax.experimental import pallas as pl
from jax.experimental.pallas import tpu as pltpu


def _round_up(x, m):
    return ((x + m - 1) // m) * m


def _ce_kernel(logits_ref, labels_ref, out_ref, acc_ref, *, tn, n_total):
    # logits_ref: (TN, C) native dtype; labels_ref: (TN, 1) int32;
    # out_ref: (8, 128) f32 per-partial output block (only [0, 0] is the sum);
    # acc_ref: (TN, 1) f32 per-row accumulator, resident across the step axis.
    p = pl.program_id(0)
    s = pl.program_id(1)
    num_s = pl.num_programs(1)

    @pl.when(s == 0)
    def _init():
        acc_ref[...] = jnp.zeros_like(acc_ref)

    x = logits_ref[...]                                    # (TN, C)
    labels = labels_ref[...]                               # (TN, 1) int32
    tn_rows, c = x.shape

    # Numerically stable log-sum-exp.  For bf16 inputs keep subtract/exp in
    # bf16 (bf16-native VPU/EUP on v6e/v7x; compiler upcasts on v5e), promote
    # to f32 at the row sums.  Other dtypes promote to f32 before exp.
    row_max = jnp.max(x, axis=-1, keepdims=True)           # (TN, 1)
    shifted = x - row_max                                  # (TN, C), <= 0
    if shifted.dtype != jnp.bfloat16:
        shifted = shifted.astype(jnp.float32)

    exp_s = jnp.exp(shifted)
    sumexp = jnp.sum(exp_s.astype(jnp.float32), axis=-1, keepdims=True)

    # Gather the true-class (shifted) logit with a single select; row_max
    # cancels between logsumexp and the true logit.
    col_ids = lax.broadcasted_iota(jnp.int32, (tn_rows, c), 1)
    true_shifted = jnp.sum(
        jnp.where(col_ids == labels, shifted, 0.0).astype(jnp.float32),
        axis=-1, keepdims=True)

    nll = jnp.log(sumexp) - true_shifted                   # (TN, 1) f32

    # Mask rows past the true N: the partial tail block and any fully-OOB
    # (clamped) blocks contribute nothing.  Garbage (even NaN/Inf) in masked
    # rows is contained because all reductions above are per-row and the mask
    # is a select, not a multiply.
    block_idx = p * num_s + s                              # unclamped index
    row_ids = block_idx * tn + lax.broadcasted_iota(jnp.int32, (tn_rows, 1), 0)
    acc_ref[...] += jnp.where(row_ids < n_total, nll, 0.0)

    @pl.when(s == num_s - 1)
    def _finalize():
        total = jnp.sum(acc_ref[...])                      # scalar partial sum
        r = lax.broadcasted_iota(jnp.int32, out_ref.shape, 0)
        cc = lax.broadcasted_iota(jnp.int32, out_ref.shape, 1)
        out_ref[...] = jnp.where((r == 0) & (cc == 0), total, 0.0)


def myloss(y_pre, y_true, *, max_rows_per_tile=None, num_partials=2):
    """Pallas equivalent of Myloss.forward(y_pre, y_true) -> scalar loss."""
    n, c = y_pre.shape
    labels = y_true.astype(jnp.int32).reshape(n, 1)

    itemsize = jnp.dtype(y_pre.dtype).itemsize
    padded_c = _round_up(c, 128)          # lane padding of the VMEM tile

    # Row tile sized by a VMEM byte budget (padded footprint), not a row cap.
    tile_budget_bytes = 2 * 1024 * 1024   # per logits VMEM buffer (padded)
    rows_cap = max(8, (tile_budget_bytes // (padded_c * itemsize)) // 8 * 8)
    rows_cap = min(rows_cap, 4096)        # keep (TN,1) f32 intermediates small
    if max_rows_per_tile is not None:
        rows_cap = min(rows_cap, max(8, (max_rows_per_tile // 8) * 8))
    tn = int(min(rows_cap, _round_up(n, 8)))

    n_blocks = pl.cdiv(n, tn)
    p_partials = int(min(max(1, num_partials), n_blocks))   # v7x: 2 TCs
    steps = pl.cdiv(n_blocks, p_partials)

    def _block_index(p, s):
        # Clamp so fully-OOB block slots (only possible in the last partial)
        # re-read the last valid block; their rows are masked in-kernel.
        return jnp.minimum(p * steps + s, n_blocks - 1)

    # VMEM budget: double-buffered logits + labels tiles, f32 intermediates,
    # per-row scratch, plus headroom; capped at 40 MiB (fits v7x's 64 MiB).
    tile_f32 = tn * padded_c * 4
    rowvec = tn * 128 * 4
    est = (2 * tn * padded_c * itemsize + 2 * rowvec      # logits + labels bufs
           + 4 * tile_f32 + 8 * rowvec                     # in-kernel temps
           + rowvec + (1 << 20))                           # scratch + headroom
    vmem_bytes = int(min(40 * 1024 * 1024, max(16 * 1024 * 1024, est)))

    kernel = functools.partial(_ce_kernel, tn=tn, n_total=n)

    out = pl.pallas_call(
        kernel,
        out_shape=jax.ShapeDtypeStruct((p_partials * 8, 128), jnp.float32),
        grid_spec=pltpu.PrefetchScalarGridSpec(
            num_scalar_prefetch=0,
            grid=(p_partials, steps),
            in_specs=[
                pl.BlockSpec((tn, c), lambda p, s: (_block_index(p, s), 0)),
                pl.BlockSpec((tn, 1), lambda p, s: (_block_index(p, s), 0)),
            ],
            out_specs=pl.BlockSpec((8, 128), lambda p, s: (p, 0)),
            scratch_shapes=[pltpu.VMEM((tn, 1), jnp.float32)],
        ),
        compiler_params=pltpu.CompilerParams(
            dimension_semantics=("parallel", "arbitrary"),
            vmem_limit_bytes=vmem_bytes,
        ),
        cost_estimate=pl.CostEstimate(
            flops=int(6 * n * c),
            transcendentals=int(n * c),
            bytes_accessed=int(n * c * itemsize + n * 4 + p_partials * 8 * 128 * 4),
        ),
    )(y_pre, labels)

    # Per-partial sums live at out[p*8, 0]; everything else is zero.
    return jnp.sum(out) * (1.0 / n)


def _reference_loss(y_pre, y_true):
    x = y_pre.astype(jnp.float32)
    lse = jax.nn.logsumexp(x, axis=-1)
    true_logit = jnp.take_along_axis(
        x, y_true.astype(jnp.int32)[:, None], axis=-1)[:, 0]
    return jnp.mean(lse - true_logit)


if __name__ == "__main__":
    key = jax.random.PRNGKey(0)
    k1, k2, k3, k4, k5, k6 = jax.random.split(key, 6)

    # Case 1: small aligned batch (matches the module's simple (N, C) usage).
    N1, C1 = 8, 16
    y_pre1 = jax.random.normal(k1, (N1, C1), dtype=jnp.float32)
    y_true1 = jax.random.randint(k2, (N1,), 0, C1, dtype=jnp.int32)
    loss1 = myloss(y_pre1, y_true1)
    jax.block_until_ready(loss1)
    ref1 = _reference_loss(y_pre1, y_true1)
    assert jnp.allclose(loss1, ref1, atol=1e-5, rtol=1e-5), (loss1, ref1)

    # Case 2: batch not a multiple of the tile, multiple blocks, two partials
    # (exercises the partial tail block, the clamped OOB block slot, the
    # per-row scratch accumulation and the per-partial output blocks).
    N2, C2 = 20, 16
    y_pre2 = jax.random.normal(k3, (N2, C2), dtype=jnp.float32)
    y_true2 = jax.random.randint(k4, (N2,), 0, C2, dtype=jnp.int32)
    loss2 = myloss(y_pre2, y_true2, max_rows_per_tile=8)
    jax.block_until_ready(loss2)
    ref2 = _reference_loss(y_pre2, y_true2)
    assert jnp.allclose(loss2, ref2, atol=1e-5, rtol=1e-5), (loss2, ref2)

    # Case 3: bf16 logits (exercises the bf16 subtract/exp path; looser tol).
    N3, C3 = 24, 16
    y_pre3 = jax.random.normal(k5, (N3, C3), dtype=jnp.float32).astype(jnp.bfloat16)
    y_true3 = jax.random.randint(k6, (N3,), 0, C3, dtype=jnp.int32)
    loss3 = myloss(y_pre3, y_true3)
    jax.block_until_ready(loss3)
    ref3 = _reference_loss(y_pre3, y_true3)
    assert jnp.allclose(loss3, ref3, atol=3e-2, rtol=3e-2), (loss3, ref3)

    print("KERNEL_OK")
</pallas_src>

<mosaic_0001>
module attributes {stable_mosaic.version = 11 : i64} {
  func.func @_ce_kernel(%arg0: i32, %arg1: i32, %arg2: memref<8x16xf32, #tpu.memory_space<vmem>>, %arg3: memref<8x1xi32, #tpu.memory_space<vmem>>, %arg4: memref<8x128xf32, #tpu.memory_space<vmem>>, %arg5: memref<8x1xf32, #tpu.memory_space<vmem>>) attributes {dimension_semantics = [#tpu.dimension_semantics<parallel>, #tpu.dimension_semantics<arbitrary>], iteration_bounds = array<i64: 1, 1>, scalar_prefetch = 0 : i64, scratch_operands = 1 : i64, tpu.core_type = #tpu.core_type<tc>, window_params = [{transform_indices = @transform_0, window_bounds = array<i64: 8, 16>}, {transform_indices = @transform_1, window_bounds = array<i64: 8, 1>}, {transform_indices = @transform_2, window_bounds = array<i64: 8, 128>}]} {
    %c0_i32 = arith.constant 0 : i32
    %0 = arith.cmpi eq, %arg1, %c0_i32 : i32
    %1 = arith.extui %0 : i1 to i32
    %c0_i32_0 = arith.constant 0 : i32
    %2 = arith.cmpi ne, %1, %c0_i32_0 : i32
    scf.if %2 {
      %cst_15 = arith.constant 0.000000e+00 : f32
      %37 = vector.broadcast %cst_15 : f32 to vector<8x1xf32>
      %c0_16 = arith.constant 0 : index
      %c0_17 = arith.constant 0 : index
      %38 = vector.load %arg5[%c0_16, %c0_17] : memref<8x1xf32, #tpu.memory_space<vmem>>, vector<8x1xf32>
      tpu.vector_store %arg5[%c0_16, %c0_17], %37 {strides = array<i32>} : memref<8x1xf32, #tpu.memory_space<vmem>>, vector<8x1xf32>,
    } else {
    }
    %c0 = arith.constant 0 : index
    %c0_1 = arith.constant 0 : index
    %3 = vector.load %arg2[%c0, %c0_1] : memref<8x16xf32, #tpu.memory_space<vmem>>, vector<8x16xf32>
    %c0_2 = arith.constant 0 : index
    %c0_3 = arith.constant 0 : index
    %4 = vector.load %arg3[%c0_2, %c0_3] : memref<8x1xi32, #tpu.memory_space<vmem>>, vector<8x1xi32>
    %cst = arith.constant dense<0xFF800000> : vector<8xf32>
    %5 = vector.multi_reduction <maximumf>, %3, %cst [1] : vector<8x16xf32> to vector<8xf32>
    %6 = vector.shape_cast %5 : vector<8xf32> to vector<8x1xf32>
    %7 = vector.broadcast %6 : vector<8x1xf32> to vector<8x16xf32>
    %8 = arith.subf %3, %7 : vector<8x16xf32>
    %9 = math.exp %8 : vector<8x16xf32>
    %cst_4 = arith.constant dense<0.000000e+00> : vector<8xf32>
    %10 = vector.multi_reduction <add>, %9, %cst_4 [1] : vector<8x16xf32> to vector<8xf32>
    %11 = vector.shape_cast %10 : vector<8xf32> to vector<8x1xf32>
    %12 = tpu.iota {dimensions = array<i32: 1>} : vector<8x16xi32>
    %13 = vector.broadcast %4 : vector<8x1xi32> to vector<8x16xi32>
    %14 = arith.cmpi eq, %12, %13 : vector<8x16xi32>
    %cst_5 = arith.constant 0.000000e+00 : f32
    %15 = vector.broadcast %cst_5 : f32 to vector<8x16xf32>
    %16 = arith.select %14, %8, %15 : vector<8x16xi1>, vector<8x16xf32>
    %cst_6 = arith.constant dense<0.000000e+00> : vector<8xf32>
    %17 = vector.multi_reduction <add>, %16, %cst_6 [1] : vector<8x16xf32> to vector<8xf32>
    %18 = vector.shape_cast %17 : vector<8xf32> to vector<8x1xf32>
    %19 = math.log %11 : vector<8x1xf32>
    %20 = arith.subf %19, %18 : vector<8x1xf32>
    %c1_i32 = arith.constant 1 : i32
    %21 = arith.muli %arg0, %c1_i32 : i32
    %22 = arith.addi %21, %arg1 : i32
    %c8_i32 = arith.constant 8 : i32
    %23 = arith.muli %22, %c8_i32 : i32
    %24 = tpu.iota {dimensions = array<i32: 0>} : vector<8x1xi32>
    %25 = vector.broadcast %23 : i32 to vector<8x1xi32>
    %26 = arith.addi %25, %24 : vector<8x1xi32>
    %c0_7 = arith.constant 0 : index
    %c0_8 = arith.constant 0 : index
    %27 = vector.load %arg5[%c0_7, %c0_8] : memref<8x1xf32, #tpu.memory_space<vmem>>, vector<8x1xf32>
    %c8_i32_9 = arith.constant 8 : i32
    %28 = vector.broadcast %c8_i32_9 : i32 to vector<8x1xi32>
    %29 = arith.cmpi slt, %26, %28 : vector<8x1xi32>
    %cst_10 = arith.constant 0.000000e+00 : f32
    %30 = vector.broadcast %cst_10 : f32 to vector<8x1xf32>
    %31 = arith.select %29, %20, %30 : vector<8x1xi1>, vector<8x1xf32>
    %32 = arith.addf %27, %31 : vector<8x1xf32>
    %c0_11 = arith.constant 0 : index
    %c0_12 = arith.constant 0 : index
    %33 = vector.load %arg5[%c0_11, %c0_12] : memref<8x1xf32, #tpu.memory_space<vmem>>, vector<8x1xf32>
    tpu.vector_store %arg5[%c0_11, %c0_12], %32 {strides = array<i32>} : memref<8x1xf32, #tpu.memory_space<vmem>>, vector<8x1xf32>,
    %c0_i32_13 = arith.constant 0 : i32
    %34 = arith.cmpi eq, %arg1, %c0_i32_13 : i32
    %35 = arith.extui %34 : i1 to i32
    %c0_i32_14 = arith.constant 0 : i32
    %36 = arith.cmpi ne, %35, %c0_i32_14 : i32
    scf.if %36 {
      %c0_15 = arith.constant 0 : index
      %c0_16 = arith.constant 0 : index
      %37 = vector.load %arg5[%c0_15, %c0_16] : memref<8x1xf32, #tpu.memory_space<vmem>>, vector<8x1xf32>
      %38 = vector.shape_cast %37 : vector<8x1xf32> to vector<1x8x1xf32>
      %cst_17 = arith.constant dense<0.000000e+00> : vector<1xf32>
      %39 = vector.multi_reduction <add>, %38, %cst_17 [1, 2] : vector<1x8x1xf32> to vector<1xf32>
      %40 = vector.shape_cast %39 : vector<1xf32> to vector<1x1x1xf32>
      %41 = vector.extract %40[0, 0, 0] : f32 from vector<1x1x1xf32>
      %42 = tpu.iota {dimensions = array<i32: 0>} : vector<8x128xi32>
      %43 = tpu.iota {dimensions = array<i32: 1>} : vector<8x128xi32>
      %c0_i32_18 = arith.constant 0 : i32
      %44 = vector.broadcast %c0_i32_18 : i32 to vector<8x128xi32>
      %45 = arith.cmpi eq, %42, %44 : vector<8x128xi32>
      %c0_i32_19 = arith.constant 0 : i32
      %46 = vector.broadcast %c0_i32_19 : i32 to vector<8x128xi32>
      %47 = arith.cmpi eq, %43, %46 : vector<8x128xi32>
      %48 = arith.andi %45, %47 : vector<8x128xi1>
      %cst_20 = arith.constant 0.000000e+00 : f32
      %49 = vector.broadcast %41 : f32 to vector<8x128xf32>
      %50 = vector.broadcast %cst_20 : f32 to vector<8x128xf32>
      %51 = arith.select %48, %49, %50 : vector<8x128xi1>, vector<8x128xf32>
      %c0_21 = arith.constant 0 : index
      %c0_22 = arith.constant 0 : index
      %52 = vector.load %arg4[%c0_21, %c0_22] : memref<8x128xf32, #tpu.memory_space<vmem>>, vector<8x128xf32>
      tpu.vector_store %arg4[%c0_21, %c0_22], %51 {strides = array<i32>} : memref<8x128xf32, #tpu.memory_space<vmem>>, vector<8x128xf32>,
    } else {
    }
    return
  }
  func.func @transform_0(%arg0: i32, %arg1: i32) -> (i32, i32) {
    %c1_i32 = arith.constant 1 : i32
    %0 = arith.muli %arg0, %c1_i32 : i32
    %1 = arith.addi %0, %arg1 : i32
    %c0_i32 = arith.constant 0 : i32
    %2 = arith.minsi %1, %c0_i32 : i32
    %c0_i32_0 = arith.constant 0 : i32
    %c0_i32_1 = arith.constant 0 : i32
    return %2, %c0_i32_0 : i32, i32
  }
  func.func @transform_1(%arg0: i32, %arg1: i32) -> (i32, i32) {
    %c1_i32 = arith.constant 1 : i32
    %0 = arith.muli %arg0, %c1_i32 : i32
    %1 = arith.addi %0, %arg1 : i32
    %c0_i32 = arith.constant 0 : i32
    %2 = arith.minsi %1, %c0_i32 : i32
    %c0_i32_0 = arith.constant 0 : i32
    %c0_i32_1 = arith.constant 0 : i32
    return %2, %c0_i32_0 : i32, i32
  }
  func.func @transform_2(%arg0: i32, %arg1: i32) -> (i32, i32) {
    %c0_i32 = arith.constant 0 : i32
    %c0_i32_0 = arith.constant 0 : i32
    return %arg0, %c0_i32 : i32, i32
  }
}

</mosaic_0001>

<llo_original>
// kernel: tpu_custom_call.1
$region0: #{tpu_custom_call.1}
  #allocation0 [shape = 'u32[]', space=smem, size = 0x4, offset = 0x4, fixed_abs, tag = 'smem constant byte address 0x4 - core index']
  #allocation1 [shape = 'u32[72,128]{1,0:T(1,128)}', space=vmem, size = 0x9000, scoped, tag = 'internal scratch']
  #allocation2 [shape = 'f32[8,1]{1,0:T(8,128)}', space=vmem, size = 0x1000, scoped, tag = 'scratch operand']
  %s0 = inlined_call_operand.vmem [shape: f32[8,16], index: 0, kind: input, shape index: {}]
  %s1 = inlined_call_operand.vmem [shape: s32[8,1], index: 1, kind: input, shape index: {}]
  %s2 = inlined_call_operand.hbm [shape: f32[8,128], index: 2, kind: output, shape index: {}]
  %s3 = sld [smem:[#allocation0]]
  $region26: #{tpu_custom_call.1} parent=0
    _
  %s5 = ssub.s32 1, %s3
  %s6 = scalar_select 0, %s5, %s3
  $region1: #{tpu_custom_call.1} parent=0
    #allocation3 [shape = 'u8[4096]{0}', space=vmem, size = 0x1000, scoped, tag = 'output window, operand 0, single buffered']
    #allocation4 [shape = 's32[1]{0}', space=sflag, size = 0x4, scoped, tag = 'scoped memory for tpu_custom_call.1']
    %7 = vsyncpa [#allocation4], 0
    // Predicated region
    $region2: #{tpu_custom_call.1} parent=1 // pred_check
      _
    $region3: #{tpu_custom_call.1} parent=1 // pred_check_branch
      %9 = sbr.rel (0) target = $region5
    $region4: #{tpu_custom_call.1} parent=1 // pred_region
      %s10 = sadd.s32 0, 0
      %p11 = scmp.lt.s32.totalorder %s10, 0
      %s12 = scalar_select %p11, %s10, 0
      %p13 = scmp.lt.s32.totalorder %s12, 0
      %s14 = scalar_select %p13, %s12, 0
      %s15 = smul.addr %s14, 8
      %s16 = scalar_lea.vmem %s0, %s15
      %s17 = sadd.s32 0, 0
      %p18 = scmp.lt.s32.totalorder %s17, 0
      %s19 = scalar_select %p18, %s17, 0
    $region5: #{tpu_custom_call.1} parent=1 // pred_fallthru
      _
    // Predicated region
    $region6: #{tpu_custom_call.1} parent=1 // pred_check
      _
    $region7: #{tpu_custom_call.1} parent=1 // pred_check_branch
      %21 = sbr.rel (0) target = $region9
    $region8: #{tpu_custom_call.1} parent=1 // pred_region
      %s22 = sadd.s32 0, 0
      %p23 = scmp.lt.s32.totalorder %s22, 0
      %s24 = scalar_select %p23, %s22, 0
      %p25 = scmp.lt.s32.totalorder %s24, 0
      %s26 = scalar_select %p25, %s24, 0
      %s27 = smul.addr %s26, 8
      %s28 = scalar_lea.vmem %s1, %s27
      %s29 = sadd.s32 0, 0
      %p30 = scmp.lt.s32.totalorder %s29, 0
      %s31 = scalar_select %p30, %s29, 0
    $region9: #{tpu_custom_call.1} parent=1 // pred_fallthru
      _
    %s32 = sadd.s32 0, 0
    %p33 = scmp.lt.s32.totalorder %s32, 0
    %s34 = scalar_select %p33, %s32, 0
    %p35 = scmp.lt.s32.totalorder %s34, 0
    %s36 = scalar_select %p35, %s34, 0
    %s37 = smul.addr %s36, 8
    %s38 = scalar_lea.vmem %s0, %s37
    %s39 = sadd.s32 0, 0
    %p40 = scmp.lt.s32.totalorder %s39, 0
    %s41 = scalar_select %p40, %s39, 0
    %p42 = scmp.lt.s32.totalorder %s41, 0
    %s43 = scalar_select %p42, %s41, 0
    %s44 = smul.addr %s43, 8
    %s45 = scalar_lea.vmem %s1, %s44
    %s46 = sadd.s32 0, 0
    %p47 = scmp.lt.s32.totalorder %s46, 0
    %s48 = scalar_select %p47, %s46, 0
    %p49 = scmp.lt.s32.totalorder %s48, 0
    %s50 = scalar_select %p49, %s48, 0
    %s51 = smul.addr %s50, 8
    %s52 = scalar_lea.vmem %s0, %s51
    %s53 = sadd.s32 0, 0
    %p54 = scmp.lt.s32.totalorder %s53, 0
    %s55 = scalar_select %p54, %s53, 0
    %s56 = sadd.s32 0, 0
    %p57 = scmp.lt.s32.totalorder %s56, 0
    %s58 = scalar_select %p57, %s56, 0
    %p59 = scmp.lt.s32.totalorder %s58, 0
    %s60 = scalar_select %p59, %s58, 0
    %s61 = smul.addr %s60, 8
    %s62 = scalar_lea.vmem %s1, %s61
    %s63 = sadd.s32 0, 0
    %p64 = scmp.lt.s32.totalorder %s63, 0
    %s65 = scalar_select %p64, %s63, 0
    %p66 = scmp.eq.s32.totalorder 0, 0
    // Predicated region
    $region10: #{tpu_custom_call.1} parent=1 // pred_check
      %p67 = pneg %p66
    $region11: #{tpu_custom_call.1} parent=1 // pred_check_branch
      %69 = sbr.rel (%p67) target = $region13
    $region12: #{tpu_custom_call.1} parent=1 // pred_region
      %vm70 = vcmask 7168
      %71 = vst.msk [vmem:[#allocation2] sm:$0xff] %vm70, 0.0
    $region13: #{tpu_custom_call.1} parent=1 // pred_fallthru
      _
    %v72 = vld [vmem:[%s52] sm:$0xff]
    %v73 = vld [vmem:[%s62] sm:$0xff]
    %vm74 = vcmask 130048
    %v75 = vsel %vm74, %v72, -inf
    %76 = vmax.xlane.f32.xlu0 %v75
    %v77 = vpop.xlane.xlu0 %76
    %v78 = vsub.f32 %v72, %v77
    %v79 = vmul.f32 %v78, 1.442695
    %v80 = vpow.pop %v79
    %v81 = vsel %vm74, %v80, 0.0
    %82 = vadd.xlane.f32.xlu0 %v81
    %v83 = vpop.xlane.xlu0 %82
    %v84 = vlaneseq
    %v85 = vand.u32 %v84, 127
    %86 = vset.pattern.permute.xlu0 0
    %87 = vperm.xlu0 %86, %v73
    %v88 = vpop.permute.xlu0 %87
    %vm89 = vcmp.eq.s32.totalorder %v85, %v88
    %v90 = vsel %vm89, %v78, 0.0
    %v91 = vsel %vm74, %v90, 0.0
    %92 = vadd.xlane.f32.xlu0 %v91
    %v93 = vpop.xlane.xlu0 %92
    %v94 = vlog2.pop %v83
    %v95 = vmul.f32 %v94, 0.6931472
    %v96 = vsub.f32 %v95, %v93
    %s97 = sadd.s32 0, 0
    %s98 = smul.u32 %s97, 8
    %v99 = vlaneseq
    %v100 = vshrl.u32 %v99, 7
    %v101 = vstv %s98
    %v102 = vadd.s32 %v101, %v100
    %v103 = vld [vmem:[#allocation2] sm:$0xff]
    %vm104 = vcmp.lt.s32.totalorder %v102, 8
    %v105 = vsel %vm104, %v96, 0.0
    %v106 = vadd.f32 %v103, %v105
    %vm107 = vcmask 7168
    %108 = vst.msk [vmem:[#allocation2] sm:$0xff] %vm107, %v106
    // Predicated region
    $region14: #{tpu_custom_call.1} parent=1 // pred_check
      %p109 = pneg %p66
    $region15: #{tpu_custom_call.1} parent=1 // pred_check_branch
      %111 = sbr.rel (%p109) target = $region17
    $region16: #{tpu_custom_call.1} parent=1 // pred_region
      %v112 = vld [vmem:[#allocation2] sm:$0xff]
      %v113 = vsel %vm107, %v112, 0.0
      %114 = vadd.xlane.f32.xlu0 %v113
      %v115 = vpop.xlane.xlu0 %114
      %v116 = vrot.slane %v115, 4
      %v117 = vadd.f32 %v115, %v116
      %v118 = vrot.slane %v117, 2
      %v119 = vadd.f32 %v117, %v118
      %v120 = vrot.slane %v119, 1
      %v121 = vadd.f32 %v119, %v120
      %s122 = vtos %v121
      %vm123 = vcmp.eq.s32.totalorder %v100, 0
      %vm124 = vcmp.eq.s32.totalorder %v85, 0
      %vm125 = vmand %vm123, %vm124
      %v126 = vstv %s122
      %v127 = vsel %vm125, %v126, 0.0
      %128 = vst [vmem:[#allocation3] sm:$0xff] %v127
    $region17: #{tpu_custom_call.1} parent=1 // pred_fallthru
      _
    // Predicated region
    $region18: #{tpu_custom_call.1} parent=1 // pred_check
      _
    $region19: #{tpu_custom_call.1} parent=1 // pred_check_branch
      %130 = sbr.rel (0) target = $region21
    $region20: #{tpu_custom_call.1} parent=1 // pred_region
      %132 = vsyncadd [#allocation4], 0
      %s134 = sshll.u32 [#allocation3], 4
      %s135 = int_to_ptr.vmem [resolvable:$true] %s134
      %s136 = sshll.u32 %s2, 4
      %s137 = int_to_ptr.hbm [resolvable:$true] %s136
      %139 = dma.vmem_to_hbm [thread:$0]  %s135, 128, %s137, [#allocation4]
    $region21: #{tpu_custom_call.1} parent=1 // pred_fallthru
      _
    // Predicated region
    $region22: #{tpu_custom_call.1} parent=1 // pred_check
      _
    $region23: #{tpu_custom_call.1} parent=1 // pred_check_branch
      %141 = sbr.rel (0) target = $region25
    $region24: #{tpu_custom_call.1} parent=1 // pred_region
      %143 = dma.done [#allocation4], 128
    $region25: #{tpu_custom_call.1} parent=1 // pred_fallthru
      _
    %144 = vsyncpa [#allocation4], 1

</llo_original>
